<compile_context>
chip_gen: v5e
topology: v5e:2x2
jax: 0.10.0
libtpu: 0.0.40
codegen_flags: <defaults>
</compile_context>

<pallas_src>
import functools
import math

import jax
import jax.numpy as jnp
from jax import lax
from jax.experimental import pallas as pl
from jax.experimental.pallas import tpu as pltpu


def _round_up(x, m):
    return (x + m - 1) // m * m


def _sublane_quantum(dtype):
    # Rows per packed sublane tile: 8 (f32/i32), 16 (bf16), 32 (i8/fp8).
    return max(8, 32 // jnp.dtype(dtype).itemsize)


def _vmem_budget_bytes():
    try:
        return int(pltpu.get_tpu_info().vmem_capacity_bytes)
    except Exception:
        return 64 * 1024 * 1024  # conservative (v7x-sized) fallback


# --------------------------------------------------------------------------
# Path 1: small vocab -> whole table resident in VMEM, sublane-group gather.
# --------------------------------------------------------------------------
def _resident_kernel(ids_ref, table_ref, out_ref, *, scale, block_tokens,
                     row_group):
    # ids_ref is (1, T) when ids are streamed per block, or (num_blocks, T)
    # when scalar-prefetched (fallback config); `% shape[0]` handles both.
    blk = pl.program_id(0) % ids_ref.shape[0]
    num_groups = block_tokens // row_group

    def body(g, carry):
        start = pl.multiple_of(g * row_group, row_group)
        # Gather row_group rows, pack to (row_group, d_model) (XLU has slack),
        # then ONE scale + full-width store instead of row_group masked stores.
        rows = [table_ref[pl.ds(ids_ref[blk, start + r], 1), :]
                for r in range(row_group)]
        tile = jnp.concatenate(rows, axis=0).astype(jnp.float32) * scale
        out_ref[pl.ds(start, row_group), :] = tile.astype(out_ref.dtype)
        return carry

    lax.fori_loop(0, num_groups, body, 0)


# --------------------------------------------------------------------------
# Path 2: large vocab -> table stays in HBM, per-row DMA gather with a deep
# in-flight ring; completed rows are stored one full sublane group at a time.
# --------------------------------------------------------------------------
def _dma_gather_kernel(ids_ref, table_hbm, out_ref, rows_vmem, sems, *,
                       scale, block_tokens, row_group, groups_ahead):
    blk = pl.program_id(0) % ids_ref.shape[0]
    num_groups = block_tokens // row_group
    ring_groups = 2 * groups_ahead          # ring depth, in row groups

    def issue(g):
        slot = (g % ring_groups) * row_group
        base = g * row_group
        for r in range(row_group):
            row = ids_ref[blk, base + r]
            pltpu.make_async_copy(table_hbm.at[pl.ds(row, 1), :],
                                  rows_vmem.at[pl.ds(slot + r, 1), :],
                                  sems.at[slot + r]).start()

    def consume(g):
        slot = pl.multiple_of((g % ring_groups) * row_group, row_group)
        base = pl.multiple_of(g * row_group, row_group)
        # Scalar id reads happen BEFORE any .wait() (SMEM forwarding), and the
        # wait descriptors use the true source rows (not a placeholder row 0).
        rows = [ids_ref[blk, base + r] for r in range(row_group)]
        for r in range(row_group):
            pltpu.make_async_copy(table_hbm.at[pl.ds(rows[r], 1), :],
                                  rows_vmem.at[pl.ds(slot + r, 1), :],
                                  sems.at[slot + r]).wait()
        tile = rows_vmem[pl.ds(slot, row_group), :].astype(jnp.float32) * scale
        out_ref[pl.ds(base, row_group), :] = tile.astype(out_ref.dtype)

    def main_body(g, carry):
        issue(g)                             # keep DMAs launching before waits
        @pl.when(g >= groups_ahead)
        def _():
            consume(g - groups_ahead)
        return carry

    lax.fori_loop(0, num_groups, main_body, 0)

    tail = min(groups_ahead, num_groups)     # drain what is still in flight

    def drain_body(i, carry):
        consume(num_groups - tail + i)
        return carry

    lax.fori_loop(0, tail, drain_body, 0)


# --------------------------------------------------------------------------
# Wrapper
# --------------------------------------------------------------------------
def input_embeddings(token_ids, emb_table, *, target_block_bytes=1 << 20,
                     max_block_tokens=1024, force_dma_gather=False):
    """Pallas equivalent of nn.Embedding(vocab, d_model)(x) * sqrt(d_model)."""
    lead_shape = token_ids.shape
    vocab_size, d_model = emb_table.shape
    esize = jnp.dtype(emb_table.dtype).itemsize
    n_tokens = int(math.prod(lead_shape))
    scale = float(math.sqrt(d_model))        # python float -> immediate vmul operand

    row_group = _sublane_quantum(emb_table.dtype)

    # ---- Token-block size T: sized by output-tile bytes (~1 MiB), sublane-
    # full, and chosen to divide n_tokens when possible (no padding + slice).
    t_cap = max(row_group,
                min(max_block_tokens,
                    target_block_bytes // max(1, d_model * esize)))
    t_cap = _round_up(t_cap, row_group)
    t_cap = min(t_cap, _round_up(n_tokens, row_group))
    T = None
    if n_tokens % row_group == 0:
        t_floor = max(row_group, (t_cap // 4) // row_group * row_group)
        for cand in range(t_cap, t_floor - 1, -row_group):
            if n_tokens % cand == 0:
                T = cand
                break
    if T is None:
        T = t_cap
    n_pad = _round_up(n_tokens, T)
    num_blocks = n_pad // T

    # ---- ids: clip (guards OOB row reads / DMAs), pad only if needed, and
    # lay out as (num_blocks, T) so each grid step gets its own SMEM tile.
    flat_ids = jnp.clip(token_ids.reshape(-1).astype(jnp.int32), 0,
                        vocab_size - 1)
    if n_pad != n_tokens:
        flat_ids = jnp.pad(flat_ids, (0, n_pad - n_tokens))
    ids2d = flat_ids.reshape(num_blocks, T)

    # ---- VMEM budgeting (headroom for Mosaic scratch; v7x has 64 MiB).
    budget = _vmem_budget_bytes()
    vmem_cap = (budget * 9) // 10
    table_bytes = vocab_size * d_model * esize
    out_block_bytes = T * d_model * esize
    slack = 2 << 20

    out_shape = jax.ShapeDtypeStruct((n_pad, d_model), emb_table.dtype)

    def build(ids_prefetched, resident, table_single_buffer):
        if ids_prefetched:
            out_spec = pl.BlockSpec((T, d_model), lambda i, ids: (i, 0))
            table_idx = lambda i, ids: (0, 0)
        else:
            out_spec = pl.BlockSpec((T, d_model), lambda i: (i, 0))
            table_idx = lambda i: (0, 0)

        if resident:
            kernel = functools.partial(_resident_kernel, scale=scale,
                                       block_tokens=T, row_group=row_group)
            if table_single_buffer:
                # Constant index_map -> DMA'd once; single-buffering halves the
                # VMEM charged to the table (doubles the residency ceiling).
                table_spec = pl.BlockSpec((vocab_size, d_model), table_idx,
                                          pipeline_mode=pl.Buffered(1))
                table_buf = 1
            else:
                table_spec = pl.BlockSpec((vocab_size, d_model), table_idx)
                table_buf = 2
            scratch = []
            vmem_need = table_buf * table_bytes + 2 * out_block_bytes + slack
        else:
            groups_ahead = max(1, min(4, T // row_group))   # up to 32 f32 rows
            ring_rows = 2 * groups_ahead * row_group
            kernel = functools.partial(_dma_gather_kernel, scale=scale,
                                       block_tokens=T, row_group=row_group,
                                       groups_ahead=groups_ahead)
            table_spec = pl.BlockSpec(memory_space=pl.ANY)  # table stays in HBM
            scratch = [pltpu.VMEM((ring_rows, d_model), emb_table.dtype),
                       pltpu.SemaphoreType.DMA((ring_rows,))]
            vmem_need = (2 * out_block_bytes + ring_rows * d_model * esize
                         + slack)

        vmem_limit = int(min(vmem_cap, max(vmem_need, 32 * 1024 * 1024)))
        params = pltpu.CompilerParams(dimension_semantics=("parallel",),
                                      vmem_limit_bytes=vmem_limit)

        if ids_prefetched:
            grid_spec = pltpu.PrefetchScalarGridSpec(
                num_scalar_prefetch=1, grid=(num_blocks,),
                in_specs=[table_spec], out_specs=out_spec,
                scratch_shapes=scratch)
            return pl.pallas_call(kernel, out_shape=out_shape,
                                  grid_spec=grid_spec, compiler_params=params)
        ids_spec = pl.BlockSpec((1, T), lambda i: (i, 0),
                                memory_space=pltpu.MemorySpace.SMEM)
        return pl.pallas_call(kernel, out_shape=out_shape, grid=(num_blocks,),
                              in_specs=[ids_spec, table_spec],
                              out_specs=out_spec, scratch_shapes=scratch,
                              compiler_params=params)

    resident_single = (not force_dma_gather) and (
        table_bytes + 2 * out_block_bytes + slack <= (vmem_cap * 8) // 10)
    resident_double = (not force_dma_gather) and (
        2 * table_bytes + 2 * out_block_bytes + slack <= (vmem_cap * 8) // 10)

    try:
        # Primary: per-block SMEM id tiles + single-buffered resident table.
        out_flat = build(False, resident_single, True)(ids2d, emb_table)
    except Exception:
        # Conservative fallback (known-good path): scalar-prefetched ids and a
        # default double-buffered table, or HBM DMA-gather if it no longer fits.
        out_flat = build(True, resident_double, False)(ids2d, emb_table)

    if n_pad != n_tokens:
        out_flat = out_flat[:n_tokens]
    return out_flat.reshape(*lead_shape, d_model)


if __name__ == "__main__":
    batch, seq = 2, 8
    d_model, vocab_size = 128, 256

    key = jax.random.PRNGKey(0)
    k_ids, k_emb = jax.random.split(key)

    token_ids = jax.random.randint(k_ids, (batch, seq), 0, vocab_size,
                                   dtype=jnp.int32)
    # nn.Embedding default init ~ N(0, 1)
    emb_table = jax.random.normal(k_emb, (vocab_size, d_model),
                                  dtype=jnp.float32)

    ref = jnp.take(emb_table, token_ids, axis=0) * math.sqrt(d_model)

    # Small-vocab path: table resident in VMEM, sublane-group gather.
    out = jax.block_until_ready(input_embeddings(token_ids, emb_table))
    assert out.shape == (batch, seq, d_model), out.shape
    assert jnp.allclose(out, ref, atol=1e-5, rtol=1e-5), "resident path mismatch"

    # Large-vocab path: manual row-DMA gather ring (forced at small shapes).
    out_dma = jax.block_until_ready(
        input_embeddings(token_ids, emb_table, force_dma_gather=True))
    assert jnp.allclose(out_dma, ref, atol=1e-5, rtol=1e-5), "dma path mismatch"

    print("KERNEL_OK")
</pallas_src>

<mosaic_0001>
module attributes {stable_mosaic.version = 11 : i64} {
  func.func @_resident_kernel(%arg0: i32, %arg1: memref<1x16xi32, #tpu.memory_space<smem>>, %arg2: memref<256x128xf32, #tpu.memory_space<vmem>>, %arg3: memref<16x128xf32, #tpu.memory_space<vmem>>) attributes {dimension_semantics = [#tpu.dimension_semantics<parallel>], iteration_bounds = array<i64: 1>, scalar_prefetch = 0 : i64, scratch_operands = 0 : i64, tpu.core_type = #tpu.core_type<tc>, window_params = [{transform_indices = @transform_0, window_bounds = array<i64: 1, 16>}, {pipeline_mode = #tpu.pipeline_mode<synchronous>, transform_indices = @transform_1, window_bounds = array<i64: 256, 128>}, {transform_indices = @transform_2, window_bounds = array<i64: 16, 128>}]} {
    %c1_i32 = arith.constant 1 : i32
    %c0_i32 = arith.constant 0 : i32
    %0 = arith.cmpi eq, %c1_i32, %c0_i32 : i32
    %c1_i32_0 = arith.constant 1 : i32
    %1 = arith.select %0, %c1_i32_0, %c1_i32 : i32
    %2 = arith.remsi %arg0, %1 : i32
    %c0_i32_1 = arith.constant 0 : i32
    %3 = arith.cmpi ne, %2, %c0_i32_1 : i32
    %c0_i32_2 = arith.constant 0 : i32
    %4 = arith.cmpi slt, %2, %c0_i32_2 : i32
    %c0_i32_3 = arith.constant 0 : i32
    %5 = arith.cmpi slt, %1, %c0_i32_3 : i32
    %6 = arith.xori %4, %5 : i1
    %7 = arith.andi %6, %3 : i1
    %8 = arith.addi %2, %1 : i32
    %9 = arith.select %7, %8, %2 : i32
    %c0_i32_4 = arith.constant 0 : i32
    %c2_i32 = arith.constant 2 : i32
    %10 = arith.addi %c0_i32_4, %c2_i32 : i32
    %c1_i32_5 = arith.constant 1 : i32
    scf.for %arg4 = %c0_i32_4 to %10 step %c1_i32_5  : i32 {
      %c8_i32 = arith.constant 8 : i32
      %11 = arith.muli %arg4, %c8_i32 : i32
      %12 = tpu.assume_multiple %11, 8 : i32
      %c0_i32_7 = arith.constant 0 : i32
      %13 = arith.addi %12, %c0_i32_7 : i32
      %14 = arith.index_cast %9 : i32 to index
      %15 = arith.index_cast %13 : i32 to index
      %16 = memref.load %arg1[%14, %15] : memref<1x16xi32, #tpu.memory_space<smem>>
      %17 = arith.index_cast %16 : i32 to index
      %c0 = arith.constant 0 : index
      %18 = vector.load %arg2[%17, %c0] : memref<256x128xf32, #tpu.memory_space<vmem>>, vector<1x128xf32>
      %c1_i32_8 = arith.constant 1 : i32
      %19 = arith.addi %12, %c1_i32_8 : i32
      %20 = arith.index_cast %9 : i32 to index
      %21 = arith.index_cast %19 : i32 to index
      %22 = memref.load %arg1[%20, %21] : memref<1x16xi32, #tpu.memory_space<smem>>
      %23 = arith.index_cast %22 : i32 to index
      %c0_9 = arith.constant 0 : index
      %24 = vector.load %arg2[%23, %c0_9] : memref<256x128xf32, #tpu.memory_space<vmem>>, vector<1x128xf32>
      %c2_i32_10 = arith.constant 2 : i32
      %25 = arith.addi %12, %c2_i32_10 : i32
      %26 = arith.index_cast %9 : i32 to index
      %27 = arith.index_cast %25 : i32 to index
      %28 = memref.load %arg1[%26, %27] : memref<1x16xi32, #tpu.memory_space<smem>>
      %29 = arith.index_cast %28 : i32 to index
      %c0_11 = arith.constant 0 : index
      %30 = vector.load %arg2[%29, %c0_11] : memref<256x128xf32, #tpu.memory_space<vmem>>, vector<1x128xf32>
      %c3_i32 = arith.constant 3 : i32
      %31 = arith.addi %12, %c3_i32 : i32
      %32 = arith.index_cast %9 : i32 to index
      %33 = arith.index_cast %31 : i32 to index
      %34 = memref.load %arg1[%32, %33] : memref<1x16xi32, #tpu.memory_space<smem>>
      %35 = arith.index_cast %34 : i32 to index
      %c0_12 = arith.constant 0 : index
      %36 = vector.load %arg2[%35, %c0_12] : memref<256x128xf32, #tpu.memory_space<vmem>>, vector<1x128xf32>
      %c4_i32 = arith.constant 4 : i32
      %37 = arith.addi %12, %c4_i32 : i32
      %38 = arith.index_cast %9 : i32 to index
      %39 = arith.index_cast %37 : i32 to index
      %40 = memref.load %arg1[%38, %39] : memref<1x16xi32, #tpu.memory_space<smem>>
      %41 = arith.index_cast %40 : i32 to index
      %c0_13 = arith.constant 0 : index
      %42 = vector.load %arg2[%41, %c0_13] : memref<256x128xf32, #tpu.memory_space<vmem>>, vector<1x128xf32>
      %c5_i32 = arith.constant 5 : i32
      %43 = arith.addi %12, %c5_i32 : i32
      %44 = arith.index_cast %9 : i32 to index
      %45 = arith.index_cast %43 : i32 to index
      %46 = memref.load %arg1[%44, %45] : memref<1x16xi32, #tpu.memory_space<smem>>
      %47 = arith.index_cast %46 : i32 to index
      %c0_14 = arith.constant 0 : index
      %48 = vector.load %arg2[%47, %c0_14] : memref<256x128xf32, #tpu.memory_space<vmem>>, vector<1x128xf32>
      %c6_i32 = arith.constant 6 : i32
      %49 = arith.addi %12, %c6_i32 : i32
      %50 = arith.index_cast %9 : i32 to index
      %51 = arith.index_cast %49 : i32 to index
      %52 = memref.load %arg1[%50, %51] : memref<1x16xi32, #tpu.memory_space<smem>>
      %53 = arith.index_cast %52 : i32 to index
      %c0_15 = arith.constant 0 : index
      %54 = vector.load %arg2[%53, %c0_15] : memref<256x128xf32, #tpu.memory_space<vmem>>, vector<1x128xf32>
      %c7_i32 = arith.constant 7 : i32
      %55 = arith.addi %12, %c7_i32 : i32
      %56 = arith.index_cast %9 : i32 to index
      %57 = arith.index_cast %55 : i32 to index
      %58 = memref.load %arg1[%56, %57] : memref<1x16xi32, #tpu.memory_space<smem>>
      %59 = arith.index_cast %58 : i32 to index
      %c0_16 = arith.constant 0 : index
      %60 = vector.load %arg2[%59, %c0_16] : memref<256x128xf32, #tpu.memory_space<vmem>>, vector<1x128xf32>
      %61 = tpu.concatenate %18, %24, %30, %36, %42, %48, %54, %60 in 0 : vector<1x128xf32>, vector<1x128xf32>, vector<1x128xf32>, vector<1x128xf32>, vector<1x128xf32>, vector<1x128xf32>, vector<1x128xf32>, vector<1x128xf32> -> vector<8x128xf32>
      %cst = arith.constant 11.3137083 : f32
      %62 = vector.broadcast %cst : f32 to vector<8x128xf32>
      %63 = arith.mulf %61, %62 : vector<8x128xf32>
      %64 = arith.index_cast %12 : i32 to index
      %c0_17 = arith.constant 0 : index
      %65 = vector.load %arg3[%64, %c0_17] : memref<16x128xf32, #tpu.memory_space<vmem>>, vector<8x128xf32>
      tpu.vector_store %arg3[%64, %c0_17], %63 {strides = array<i32>} : memref<16x128xf32, #tpu.memory_space<vmem>>, vector<8x128xf32>,
    }
    %c2_i32_6 = arith.constant 2 : i32
    return
  }
  func.func @transform_0(%arg0: i32) -> (i32, i32) {
    %c0_i32 = arith.constant 0 : i32
    %c0_i32_0 = arith.constant 0 : i32
    return %arg0, %c0_i32 : i32, i32
  }
  func.func @transform_1(%arg0: i32) -> (i32, i32) {
    %c0_i32 = arith.constant 0 : i32
    %c0_i32_0 = arith.constant 0 : i32
    %c0_i32_1 = arith.constant 0 : i32
    return %c0_i32, %c0_i32_0 : i32, i32
  }
  func.func @transform_2(%arg0: i32) -> (i32, i32) {
    %c0_i32 = arith.constant 0 : i32
    %c0_i32_0 = arith.constant 0 : i32
    return %arg0, %c0_i32 : i32, i32
  }
}

module attributes {stable_mosaic.version = 11 : i64} {
  func.func @_resident_kernel(%arg0: i32, %arg1: memref<1x16xi32, #tpu.memory_space<smem>>, %arg2: memref<256x128xf32, #tpu.memory_space<vmem>>, %arg3: memref<16x128xf32, #tpu.memory_space<vmem>>) attributes {dimension_semantics = [#tpu.dimension_semantics<parallel>], iteration_bounds = array<i64: 1>, scalar_prefetch = 1 : i64, scratch_operands = 0 : i64, tpu.core_type = #tpu.core_type<tc>, window_params = [{pipeline_mode = #tpu.pipeline_mode<synchronous>, transform_indices = @transform_0, window_bounds = array<i64: 256, 128>}, {transform_indices = @transform_1, window_bounds = array<i64: 16, 128>}]} {
    %c1_i32 = arith.constant 1 : i32
    %c0_i32 = arith.constant 0 : i32
    %0 = arith.cmpi eq, %c1_i32, %c0_i32 : i32
    %c1_i32_0 = arith.constant 1 : i32
    %1 = arith.select %0, %c1_i32_0, %c1_i32 : i32
    %2 = arith.remsi %arg0, %1 : i32
    %c0_i32_1 = arith.constant 0 : i32
    %3 = arith.cmpi ne, %2, %c0_i32_1 : i32
    %c0_i32_2 = arith.constant 0 : i32
    %4 = arith.cmpi slt, %2, %c0_i32_2 : i32
    %c0_i32_3 = arith.constant 0 : i32
    %5 = arith.cmpi slt, %1, %c0_i32_3 : i32
    %6 = arith.xori %4, %5 : i1
    %7 = arith.andi %6, %3 : i1
    %8 = arith.addi %2, %1 : i32
    %9 = arith.select %7, %8, %2 : i32
    %c0_i32_4 = arith.constant 0 : i32
    %c2_i32 = arith.constant 2 : i32
    %10 = arith.addi %c0_i32_4, %c2_i32 : i32
    %c1_i32_5 = arith.constant 1 : i32
    scf.for %arg4 = %c0_i32_4 to %10 step %c1_i32_5  : i32 {
      %c8_i32 = arith.constant 8 : i32
      %11 = arith.muli %arg4, %c8_i32 : i32
      %12 = tpu.assume_multiple %11, 8 : i32
      %c0_i32_7 = arith.constant 0 : i32
      %13 = arith.addi %12, %c0_i32_7 : i32
      %14 = arith.index_cast %9 : i32 to index
      %15 = arith.index_cast %13 : i32 to index
      %16 = memref.load %arg1[%14, %15] : memref<1x16xi32, #tpu.memory_space<smem>>
      %17 = arith.index_cast %16 : i32 to index
      %c0 = arith.constant 0 : index
      %18 = vector.load %arg2[%17, %c0] : memref<256x128xf32, #tpu.memory_space<vmem>>, vector<1x128xf32>
      %c1_i32_8 = arith.constant 1 : i32
      %19 = arith.addi %12, %c1_i32_8 : i32
      %20 = arith.index_cast %9 : i32 to index
      %21 = arith.index_cast %19 : i32 to index
      %22 = memref.load %arg1[%20, %21] : memref<1x16xi32, #tpu.memory_space<smem>>
      %23 = arith.index_cast %22 : i32 to index
      %c0_9 = arith.constant 0 : index
      %24 = vector.load %arg2[%23, %c0_9] : memref<256x128xf32, #tpu.memory_space<vmem>>, vector<1x128xf32>
      %c2_i32_10 = arith.constant 2 : i32
      %25 = arith.addi %12, %c2_i32_10 : i32
      %26 = arith.index_cast %9 : i32 to index
      %27 = arith.index_cast %25 : i32 to index
      %28 = memref.load %arg1[%26, %27] : memref<1x16xi32, #tpu.memory_space<smem>>
      %29 = arith.index_cast %28 : i32 to index
      %c0_11 = arith.constant 0 : index
      %30 = vector.load %arg2[%29, %c0_11] : memref<256x128xf32, #tpu.memory_space<vmem>>, vector<1x128xf32>
      %c3_i32 = arith.constant 3 : i32
      %31 = arith.addi %12, %c3_i32 : i32
      %32 = arith.index_cast %9 : i32 to index
      %33 = arith.index_cast %31 : i32 to index
      %34 = memref.load %arg1[%32, %33] : memref<1x16xi32, #tpu.memory_space<smem>>
      %35 = arith.index_cast %34 : i32 to index
      %c0_12 = arith.constant 0 : index
      %36 = vector.load %arg2[%35, %c0_12] : memref<256x128xf32, #tpu.memory_space<vmem>>, vector<1x128xf32>
      %c4_i32 = arith.constant 4 : i32
      %37 = arith.addi %12, %c4_i32 : i32
      %38 = arith.index_cast %9 : i32 to index
      %39 = arith.index_cast %37 : i32 to index
      %40 = memref.load %arg1[%38, %39] : memref<1x16xi32, #tpu.memory_space<smem>>
      %41 = arith.index_cast %40 : i32 to index
      %c0_13 = arith.constant 0 : index
      %42 = vector.load %arg2[%41, %c0_13] : memref<256x128xf32, #tpu.memory_space<vmem>>, vector<1x128xf32>
      %c5_i32 = arith.constant 5 : i32
      %43 = arith.addi %12, %c5_i32 : i32
      %44 = arith.index_cast %9 : i32 to index
      %45 = arith.index_cast %43 : i32 to index
      %46 = memref.load %arg1[%44, %45] : memref<1x16xi32, #tpu.memory_space<smem>>
      %47 = arith.index_cast %46 : i32 to index
      %c0_14 = arith.constant 0 : index
      %48 = vector.load %arg2[%47, %c0_14] : memref<256x128xf32, #tpu.memory_space<vmem>>, vector<1x128xf32>
      %c6_i32 = arith.constant 6 : i32
      %49 = arith.addi %12, %c6_i32 : i32
      %50 = arith.index_cast %9 : i32 to index
      %51 = arith.index_cast %49 : i32 to index
      %52 = memref.load %arg1[%50, %51] : memref<1x16xi32, #tpu.memory_space<smem>>
      %53 = arith.index_cast %52 : i32 to index
      %c0_15 = arith.constant 0 : index
      %54 = vector.load %arg2[%53, %c0_15] : memref<256x128xf32, #tpu.memory_space<vmem>>, vector<1x128xf32>
      %c7_i32 = arith.constant 7 : i32
      %55 = arith.addi %12, %c7_i32 : i32
      %56 = arith.index_cast %9 : i32 to index
      %57 = arith.index_cast %55 : i32 to index
      %58 = memref.load %arg1[%56, %57] : memref<1x16xi32, #tpu.memory_space<smem>>
      %59 = arith.index_cast %58 : i32 to index
      %c0_16 = arith.constant 0 : index
      %60 = vector.load %arg2[%59, %c0_16] : memref<256x128xf32, #tpu.memory_space<vmem>>, vector<1x128xf32>
      %61 = tpu.concatenate %18, %24, %30, %36, %42, %48, %54, %60 in 0 : vector<1x128xf32>, vector<1x128xf32>, vector<1x128xf32>, vector<1x128xf32>, vector<1x128xf32>, vector<1x128xf32>, vector<1x128xf32>, vector<1x128xf32> -> vector<8x128xf32>
      %cst = arith.constant 11.3137083 : f32
      %62 = vector.broadcast %cst : f32 to vector<8x128xf32>
      %63 = arith.mulf %61, %62 : vector<8x128xf32>
      %64 = arith.index_cast %12 : i32 to index
      %c0_17 = arith.constant 0 : index
      %65 = vector.load %arg3[%64, %c0_17] : memref<16x128xf32, #tpu.memory_space<vmem>>, vector<8x128xf32>
      tpu.vector_store %arg3[%64, %c0_17], %63 {strides = array<i32>} : memref<16x128xf32, #tpu.memory_space<vmem>>, vector<8x128xf32>,
    }
    %c2_i32_6 = arith.constant 2 : i32
    return
  }
  func.func @transform_0(%arg0: i32, %arg1: memref<1x16xi32, #tpu.memory_space<smem>>) -> (i32, i32) {
    %c0_i32 = arith.constant 0 : i32
    %c0_i32_0 = arith.constant 0 : i32
    %c0_i32_1 = arith.constant 0 : i32
    return %c0_i32, %c0_i32_0 : i32, i32
  }
  func.func @transform_1(%arg0: i32, %arg1: memref<1x16xi32, #tpu.memory_space<smem>>) -> (i32, i32) {
    %c0_i32 = arith.constant 0 : i32
    %c0_i32_0 = arith.constant 0 : i32
    return %arg0, %c0_i32 : i32, i32
  }
}

</mosaic_0001>

<llo_original>
// kernel: tpu_custom_call.1
$region0: #{tpu_custom_call.1}
  #allocation0 [shape = 'u32[]', space=smem, size = 0x4, offset = 0x4, fixed_abs, tag = 'smem constant byte address 0x4 - core index']
  #allocation1 [shape = 'u32[72,128]{1,0:T(1,128)}', space=vmem, size = 0x9000, scoped, tag = 'internal scratch']
  %s0 = inlined_call_operand.hbm [shape: s32[1,16], index: 0, kind: input, shape index: {}]
  %s1 = inlined_call_operand.hbm [shape: f32[256,128], index: 1, kind: input, shape index: {}]
  %s2 = inlined_call_operand.hbm [shape: f32[16,128], index: 2, kind: output, shape index: {}]
  %s3 = sld [smem:[#allocation0]]
  $region33: #{tpu_custom_call.1} parent=0
    _
  %s5 = ssub.s32 1, %s3
  %s6 = scalar_select 0, %s5, %s3
  $region1: #{tpu_custom_call.1} parent=0
    #allocation2 [shape = 'u8[512]{0}', space=smem, size = 0x200, scoped, tag = 'input window, operand 0, single buffered']
    #allocation3 [shape = 's32[1]{0}', space=sflag, size = 0x4, scoped, tag = 'scoped memory for tpu_custom_call.1']
    #allocation4 [shape = 's32[1]{0}', space=sflag, size = 0x4, scoped, tag = 'scoped memory for tpu_custom_call.1']
    #allocation5 [shape = 's32[1]{0}', space=sflag, size = 0x4, scoped, tag = 'scoped memory for tpu_custom_call.1']
    #allocation6 [shape = 'u8[131072]{0}', space=vmem, size = 0x20000, scoped, tag = 'input window, operand 1, single buffered']
    #allocation7 [shape = 'u8[8192]{0}', space=vmem, size = 0x2000, scoped, tag = 'output window, operand 0, single buffered']
    %7 = vsyncpa [#allocation5], 0
    %8 = vsyncpa [#allocation3], 0
    %9 = vsyncpa [#allocation4], 0
    // Predicated region
    $region2: #{tpu_custom_call.1} parent=1 // pred_check
      _
    $region3: #{tpu_custom_call.1} parent=1 // pred_check_branch
      %11 = sbr.rel (0) target = $region5
    $region4: #{tpu_custom_call.1} parent=1 // pred_region
      %13 = vsyncadd [#allocation5], 0
      %s15 = sshll.u32 %s0, 4
      %s16 = int_to_ptr.hbm [resolvable:$true] %s15
      %18 = dma.hbm_to_smem %s16, 16, [#allocation2], [#allocation5]
    $region5: #{tpu_custom_call.1} parent=1 // pred_fallthru
      _
    // Predicated region
    $region6: #{tpu_custom_call.1} parent=1 // pred_check
      _
    $region7: #{tpu_custom_call.1} parent=1 // pred_check_branch
      %20 = sbr.rel (0) target = $region9
    $region8: #{tpu_custom_call.1} parent=1 // pred_region
      %22 = vsyncadd [#allocation3], 0
      %s23 = sshll.u32 %s1, 4
      %s24 = int_to_ptr.hbm [resolvable:$true] %s23
      %s25 = sshll.u32 [#allocation6], 4
      %s26 = int_to_ptr.vmem [resolvable:$true] %s25
      %31 = dma.hbm_to_vmem [thread:$0]  %s24, 4096, %s26, [#allocation3], 128, 128, 8
    $region9: #{tpu_custom_call.1} parent=1 // pred_fallthru
      _
    // Predicated region
    $region10: #{tpu_custom_call.1} parent=1 // pred_check
      _
    $region11: #{tpu_custom_call.1} parent=1 // pred_check_branch
      %33 = sbr.rel (0) target = $region13
    $region12: #{tpu_custom_call.1} parent=1 // pred_region
      %35 = dma.done [#allocation5], 16
    $region13: #{tpu_custom_call.1} parent=1 // pred_fallthru
      _
    // Predicated region
    $region14: #{tpu_custom_call.1} parent=1 // pred_check
      _
    $region15: #{tpu_custom_call.1} parent=1 // pred_check_branch
      %37 = sbr.rel (0) target = $region17
    $region16: #{tpu_custom_call.1} parent=1 // pred_region
      %39 = dma.done [#allocation3], 4096
    $region17: #{tpu_custom_call.1} parent=1 // pred_fallthru
      _
    %40 = sfence
    loop: start=0, step=1, limit=2
    $region18: #{tpu_custom_call.1} parent=1 // loop_pre_header
      _
    $region19: #{tpu_custom_call.1} parent=1 // loop_header
      %s42 = sphi 0, %s46
      %p43 = scmp.ge.s32.totalorder %s42, 2
    $region20: #{tpu_custom_call.1} parent=1 // loop_header_branch
      %45 = sbr.rel (%p43) target = $region24
    $region21: #{tpu_custom_call.1} parent=1 // loop_body
      %s47 = smul.u32 %s42, 8
      %s48 = sld [smem:[#allocation2 + %s47]]
      %s49 = scalar_lea.vmem [#allocation6], %s48
      %v50 = vld [vmem:[%s49] sm:$0x1]
      %s51 = sadd.s32 %s47, 1
      %s52 = sld [smem:[#allocation2 + %s51]]
      %s53 = scalar_lea.vmem [#allocation6], %s52
      %v54 = vld [vmem:[%s53] sm:$0x1]
      %s55 = sadd.s32 %s47, 2
      %s56 = sld [smem:[#allocation2 + %s55]]
      %s57 = scalar_lea.vmem [#allocation6], %s56
      %v58 = vld [vmem:[%s57] sm:$0x1]
      %s59 = sadd.s32 %s47, 3
      %s60 = sld [smem:[#allocation2 + %s59]]
      %s61 = scalar_lea.vmem [#allocation6], %s60
      %v62 = vld [vmem:[%s61] sm:$0x1]
      %s63 = sadd.s32 %s47, 4
      %s64 = sld [smem:[#allocation2 + %s63]]
      %s65 = scalar_lea.vmem [#allocation6], %s64
      %v66 = vld [vmem:[%s65] sm:$0x1]
      %s67 = sadd.s32 %s47, 5
      %s68 = sld [smem:[#allocation2 + %s67]]
      %s69 = scalar_lea.vmem [#allocation6], %s68
      %v70 = vld [vmem:[%s69] sm:$0x1]
      %s71 = sadd.s32 %s47, 6
      %s72 = sld [smem:[#allocation2 + %s71]]
      %s73 = scalar_lea.vmem [#allocation6], %s72
      %v74 = vld [vmem:[%s73] sm:$0x1]
      %s75 = sadd.s32 %s47, 7
      %s76 = sld [smem:[#allocation2 + %s75]]
      %s77 = scalar_lea.vmem [#allocation6], %s76
      %v78 = vld [vmem:[%s77] sm:$0x1]
      %v80 = vrot.slane %v54, 7
      %v83 = vrot.slane %v58, 6
      %v86 = vrot.slane %v62, 5
      %v89 = vrot.slane %v66, 4
      %v92 = vrot.slane %v70, 3
      %v95 = vrot.slane %v74, 2
      %v98 = vrot.slane %v78, 1
      %vm100 = vcmask 1040384
      %v101 = vsel %vm100, %v50, %v80
      %vm102 = vcmask 1041408
      %v103 = vsel %vm102, %v101, %v83
      %vm104 = vcmask 1042432
      %v105 = vsel %vm104, %v103, %v86
      %vm106 = vcmask 1043456
      %v107 = vsel %vm106, %v105, %v89
      %vm108 = vcmask 1044480
      %v109 = vsel %vm108, %v107, %v92
      %vm110 = vcmask 1045504
      %v111 = vsel %vm110, %v109, %v95
      %vm112 = vcmask 1046528
      %v113 = vsel %vm112, %v111, %v98
      %v114 = vmul.f32 %v113, 11.313708
      %s115 = scalar_lea.vmem [#allocation7], %s47
      %116 = vst [vmem:[%s115] sm:$0xff] %v114
    $region22: #{tpu_custom_call.1} parent=1 // loop_footer
      %s46 = sadd.s32 1, %s42
    $region23: #{tpu_custom_call.1} parent=1 // loop_footer_branch
      %41 = sbr.rel target = $region19
    $region24: #{tpu_custom_call.1} parent=1 // loop_exit
      _
    // Predicated region
    $region25: #{tpu_custom_call.1} parent=1 // pred_check
      _
    $region26: #{tpu_custom_call.1} parent=1 // pred_check_branch
      %118 = sbr.rel (0) target = $region28
    $region27: #{tpu_custom_call.1} parent=1 // pred_region
      %120 = vsyncadd [#allocation4], 0
      %s121 = sshll.u32 [#allocation7], 4
      %s122 = int_to_ptr.vmem [resolvable:$true] %s121
      %s123 = sshll.u32 %s2, 4
      %s124 = int_to_ptr.hbm [resolvable:$true] %s123
      %129 = dma.vmem_to_hbm [thread:$0]  %s122, 256, %s124, [#allocation4], 128, 128, 8
    $region28: #{tpu_custom_call.1} parent=1 // pred_fallthru
      _
    // Predicated region
    $region29: #{tpu_custom_call.1} parent=1 // pred_check
      _
    $region30: #{tpu_custom_call.1} parent=1 // pred_check_branch
      %131 = sbr.rel (0) target = $region32
    $region31: #{tpu_custom_call.1} parent=1 // pred_region
      %133 = dma.done [#allocation4], 256
    $region32: #{tpu_custom_call.1} parent=1 // pred_fallthru
      _
    %134 = vsyncpa [#allocation3], 1
    %135 = vsyncpa [#allocation4], 1
    %136 = vsyncpa [#allocation5], 1

// kernel: tpu_custom_call.1
$region0: #{tpu_custom_call.1}
  #allocation0 [shape = 'u32[]', space=smem, size = 0x4, offset = 0x4, fixed_abs, tag = 'smem constant byte address 0x4 - core index']
  #allocation1 [shape = 'u32[72,128]{1,0:T(1,128)}', space=vmem, size = 0x9000, scoped, tag = 'internal scratch']
  #allocation2 [shape = 's32[1]{0}', space=sflag, size = 0x4, scoped, tag = 'scoped memory for tpu_custom_call.1']
  #allocation3 [shape = 'u8[512]{0}', space=smem, size = 0x200, scoped, tag = 'prefetched SMEM operand 0']
  %s0 = inlined_call_operand.hbm [shape: s32[1,16], index: 0, kind: input, shape index: {}]
  %s1 = inlined_call_operand.hbm [shape: f32[256,128], index: 1, kind: input, shape index: {}]
  %s2 = inlined_call_operand.hbm [shape: f32[16,128], index: 2, kind: output, shape index: {}]
  %s3 = sld [smem:[#allocation0]]
  $region25: #{tpu_custom_call.1} parent=0
    _
  %s5 = ssub.s32 1, %s3
  %s6 = scalar_select 0, %s5, %s3
  %s8 = sshll.u32 %s0, 4
  %s9 = int_to_ptr.hbm [resolvable:$true] %s8
  %11 = dma.hbm_to_smem %s9, 16, [#allocation3], [#allocation2]
  %13 = dma.done [#allocation2], 16
  %14 = sfence
  $region1: #{tpu_custom_call.1} parent=0
    #allocation4 [shape = 'u8[131072]{0}', space=vmem, size = 0x20000, scoped, tag = 'input window, operand 1, single buffered']
    #allocation5 [shape = 's32[1]{0}', space=sflag, size = 0x4, scoped, tag = 'scoped memory for tpu_custom_call.1']
    #allocation6 [shape = 's32[1]{0}', space=sflag, size = 0x4, scoped, tag = 'scoped memory for tpu_custom_call.1']
    #allocation7 [shape = 'u8[8192]{0}', space=vmem, size = 0x2000, scoped, tag = 'output window, operand 0, single buffered']
    %15 = vsyncpa [#allocation5], 0
    %16 = vsyncpa [#allocation6], 0
    // Predicated region
    $region2: #{tpu_custom_call.1} parent=1 // pred_check
      _
    $region3: #{tpu_custom_call.1} parent=1 // pred_check_branch
      %18 = sbr.rel (0) target = $region5
    $region4: #{tpu_custom_call.1} parent=1 // pred_region
      %20 = vsyncadd [#allocation5], 0
      %s21 = sshll.u32 %s1, 4
      %s22 = int_to_ptr.hbm [resolvable:$true] %s21
      %s23 = sshll.u32 [#allocation4], 4
      %s24 = int_to_ptr.vmem [resolvable:$true] %s23
      %29 = dma.hbm_to_vmem [thread:$0]  %s22, 4096, %s24, [#allocation5], 128, 128, 8
    $region5: #{tpu_custom_call.1} parent=1 // pred_fallthru
      _
    // Predicated region
    $region6: #{tpu_custom_call.1} parent=1 // pred_check
      _
    $region7: #{tpu_custom_call.1} parent=1 // pred_check_branch
      %31 = sbr.rel (0) target = $region9
    $region8: #{tpu_custom_call.1} parent=1 // pred_region
      %33 = dma.done [#allocation5], 4096
    $region9: #{tpu_custom_call.1} parent=1 // pred_fallthru
      _
    loop: start=0, step=1, limit=2
    $region10: #{tpu_custom_call.1} parent=1 // loop_pre_header
      _
    $region11: #{tpu_custom_call.1} parent=1 // loop_header
      %s35 = sphi 0, %s39
      %p36 = scmp.ge.s32.totalorder %s35, 2
    $region12: #{tpu_custom_call.1} parent=1 // loop_header_branch
      %38 = sbr.rel (%p36) target = $region16
    $region13: #{tpu_custom_call.1} parent=1 // loop_body
      %s40 = smul.u32 %s35, 8
      %s41 = sld [smem:[#allocation3 + %s40]]
      %s42 = scalar_lea.vmem [#allocation4], %s41
      %v43 = vld [vmem:[%s42] sm:$0x1]
      %s44 = sadd.s32 %s40, 1
      %s45 = sld [smem:[#allocation3 + %s44]]
      %s46 = scalar_lea.vmem [#allocation4], %s45
      %v47 = vld [vmem:[%s46] sm:$0x1]
      %s48 = sadd.s32 %s40, 2
      %s49 = sld [smem:[#allocation3 + %s48]]
      %s50 = scalar_lea.vmem [#allocation4], %s49
      %v51 = vld [vmem:[%s50] sm:$0x1]
      %s52 = sadd.s32 %s40, 3
      %s53 = sld [smem:[#allocation3 + %s52]]
      %s54 = scalar_lea.vmem [#allocation4], %s53
      %v55 = vld [vmem:[%s54] sm:$0x1]
      %s56 = sadd.s32 %s40, 4
      %s57 = sld [smem:[#allocation3 + %s56]]
      %s58 = scalar_lea.vmem [#allocation4], %s57
      %v59 = vld [vmem:[%s58] sm:$0x1]
      %s60 = sadd.s32 %s40, 5
      %s61 = sld [smem:[#allocation3 + %s60]]
      %s62 = scalar_lea.vmem [#allocation4], %s61
      %v63 = vld [vmem:[%s62] sm:$0x1]
      %s64 = sadd.s32 %s40, 6
      %s65 = sld [smem:[#allocation3 + %s64]]
      %s66 = scalar_lea.vmem [#allocation4], %s65
      %v67 = vld [vmem:[%s66] sm:$0x1]
      %s68 = sadd.s32 %s40, 7
      %s69 = sld [smem:[#allocation3 + %s68]]
      %s70 = scalar_lea.vmem [#allocation4], %s69
      %v71 = vld [vmem:[%s70] sm:$0x1]
      %v73 = vrot.slane %v47, 7
      %v76 = vrot.slane %v51, 6
      %v79 = vrot.slane %v55, 5
      %v82 = vrot.slane %v59, 4
      %v85 = vrot.slane %v63, 3
      %v88 = vrot.slane %v67, 2
      %v91 = vrot.slane %v71, 1
      %vm93 = vcmask 1040384
      %v94 = vsel %vm93, %v43, %v73
      %vm95 = vcmask 1041408
      %v96 = vsel %vm95, %v94, %v76
      %vm97 = vcmask 1042432
      %v98 = vsel %vm97, %v96, %v79
      %vm99 = vcmask 1043456
      %v100 = vsel %vm99, %v98, %v82
      %vm101 = vcmask 1044480
      %v102 = vsel %vm101, %v100, %v85
      %vm103 = vcmask 1045504
      %v104 = vsel %vm103, %v102, %v88
      %vm105 = vcmask 1046528
      %v106 = vsel %vm105, %v104, %v91
      %v107 = vmul.f32 %v106, 11.313708
      %s108 = scalar_lea.vmem [#allocation7], %s40
      %109 = vst [vmem:[%s108] sm:$0xff] %v107
    $region14: #{tpu_custom_call.1} parent=1 // loop_footer
      %s39 = sadd.s32 1, %s35
    $region15: #{tpu_custom_call.1} parent=1 // loop_footer_branch
      %34 = sbr.rel target = $region11
    $region16: #{tpu_custom_call.1} parent=1 // loop_exit
      _
    // Predicated region
    $region17: #{tpu_custom_call.1} parent=1 // pred_check
      _
    $region18: #{tpu_custom_call.1} parent=1 // pred_check_branch
      %111 = sbr.rel (0) target = $region20
    $region19: #{tpu_custom_call.1} parent=1 // pred_region
      %113 = vsyncadd [#allocation6], 0
      %s114 = sshll.u32 [#allocation7], 4
      %s115 = int_to_ptr.vmem [resolvable:$true] %s114
      %s116 = sshll.u32 %s2, 4
      %s117 = int_to_ptr.hbm [resolvable:$true] %s116
      %122 = dma.vmem_to_hbm [thread:$0]  %s115, 256, %s117, [#allocation6], 128, 128, 8
    $region20: #{tpu_custom_call.1} parent=1 // pred_fallthru
      _
    // Predicated region
    $region21: #{tpu_custom_call.1} parent=1 // pred_check
      _
    $region22: #{tpu_custom_call.1} parent=1 // pred_check_branch
      %124 = sbr.rel (0) target = $region24
    $region23: #{tpu_custom_call.1} parent=1 // pred_region
      %126 = dma.done [#allocation6], 256
    $region24: #{tpu_custom_call.1} parent=1 // pred_fallthru
      _
    %127 = vsyncpa [#allocation5], 1
    %128 = vsyncpa [#allocation6], 1

</llo_original>
